<compile_context>
chip_gen: v7x
topology: tpu7x:2x2x1
jax: 0.10.0
libtpu: 0.0.40
codegen_flags: <defaults>
</compile_context>

<pallas_src>
import jax
import jax.numpy as jnp
from jax.experimental import pallas as pl
from jax.experimental.pallas import tpu as pltpu

N_FEATURES = 64                              # n_features
HIDDEN = int(1 + int(N_FEATURES ** 0.5))     # int(1 + sqrt(n_features)) = 9
N_LAYERS = 10                                # 5 encoder + 5 decoder Linear layers
BATCH = 8
PAD = 128                                    # lane-pad every hidden dim to 128
BATCH_TILE = 256                             # rows per grid step (use 128 on v5e)


# --------------------------------------------------------------------------
# Kernel
# --------------------------------------------------------------------------
def ae_kernel(x_ref, w_ref, b_ref, out_ref):
    """x_ref: (bt, 64) f32 | w_ref: (10, 128, 128) bf16 | b_ref: (10, 128) f32
    out_ref: (bt, 64) f32.

    Statically unrolled 10-layer chain. Zero-padded weight rows/cols and zero
    bias pad lanes keep padded lanes at 0 through every tanh layer; the final
    sigmoid is only applied to (and stored for) the live :64 output lanes.
    """
    # Layer 0: live K is only N_FEATURES -> static slice of the padded weight.
    h = x_ref[...].astype(jnp.bfloat16)                              # (bt, 64)
    w0 = w_ref[0][:N_FEATURES, :]                                    # (64, 128)
    z = jnp.dot(h, w0, preferred_element_type=jnp.float32)
    h = jnp.tanh(z + b_ref[pl.ds(0, 1), :])                          # (bt, 128) f32

    # Hidden layers 1..8 (tanh).
    for i in range(1, N_LAYERS - 1):
        z = jnp.dot(h.astype(jnp.bfloat16), w_ref[i],
                    preferred_element_type=jnp.float32)
        h = jnp.tanh(z + b_ref[pl.ds(i, 1), :])

    # Final layer (sigmoid) -> only the first N_FEATURES lanes are real.
    z = jnp.dot(h.astype(jnp.bfloat16), w_ref[N_LAYERS - 1],
                preferred_element_type=jnp.float32)
    z = z + b_ref[pl.ds(N_LAYERS - 1, 1), :]
    out_ref[...] = jax.nn.sigmoid(z[:, :N_FEATURES])


# --------------------------------------------------------------------------
# Host-side wrapper
# --------------------------------------------------------------------------
@jax.jit
def autoencoder_forward(x, w_stack, b_stack):
    """x: [B, N_FEATURES] f32 -> reconstruction [B, N_FEATURES] f32."""
    B, F = x.shape
    assert F == N_FEATURES
    bt = min(B, BATCH_TILE)
    assert B % bt == 0 and bt % 8 == 0, "batch must be a multiple of 8 (and of the tile)"

    return pl.pallas_call(
        ae_kernel,
        out_shape=jax.ShapeDtypeStruct((B, F), jnp.float32),
        grid_spec=pltpu.PrefetchScalarGridSpec(
            num_scalar_prefetch=0,
            grid=(B // bt,),
            in_specs=[
                pl.BlockSpec((bt, F), lambda i: (i, 0)),                   # activations
                pl.BlockSpec((N_LAYERS, PAD, PAD), lambda i: (0, 0, 0)),   # weights (resident)
                pl.BlockSpec((N_LAYERS, PAD), lambda i: (0, 0)),           # biases  (resident)
            ],
            out_specs=pl.BlockSpec((bt, F), lambda i: (i, 0)),
        ),
        compiler_params=pltpu.CompilerParams(
            dimension_semantics=("arbitrary",)),
    )(x, w_stack, b_stack)


# --------------------------------------------------------------------------
# Parameter construction (done once, outside the per-call path)
# --------------------------------------------------------------------------
def init_params(key, n_features):
    """Deterministic params mimicking nn.Linear default init (U[-1/sqrt(in), 1/sqrt(in)])."""
    h = int(1 + int(n_features ** 0.5))
    dims = [n_features] + [h] * (N_LAYERS - 1) + [n_features]
    params = []
    for i in range(N_LAYERS):
        in_d, out_d = dims[i], dims[i + 1]
        key, kw, kb = jax.random.split(key, 3)
        bound = 1.0 / (in_d ** 0.5)
        w = jax.random.uniform(kw, (in_d, out_d), jnp.float32, -bound, bound)
        b = jax.random.uniform(kb, (out_d,), jnp.float32, -bound, bound)
        params.append((w, b))
    return params


def pack_params(params):
    """Zero-pad to 128 lanes and stack: weights -> (10,128,128) bf16, biases -> (10,128) f32.

    NOTE: the zero-initialization of the pad region is a correctness invariant
    of ae_kernel (keeps padded lanes at 0 through every tanh layer).
    """
    w_stack = jnp.zeros((N_LAYERS, PAD, PAD), jnp.float32)
    b_stack = jnp.zeros((N_LAYERS, PAD), jnp.float32)
    for i, (w, b) in enumerate(params):
        in_d, out_d = w.shape
        w_stack = w_stack.at[i, :in_d, :out_d].set(w)
        b_stack = b_stack.at[i, :out_d].set(b)
    return w_stack.astype(jnp.bfloat16), b_stack


# --------------------------------------------------------------------------
# Pure-JAX references
# --------------------------------------------------------------------------
def reference_f32(x, params):
    h = x
    for i, (w, b) in enumerate(params):
        z = h @ w + b
        h = jnp.tanh(z) if i < len(params) - 1 else jax.nn.sigmoid(z)
    return h


def reference_bf16(x, params):
    """Matches the kernel's numerics: bf16 matmul operands, f32 accumulation."""
    h = x.astype(jnp.float32)
    for i, (w, b) in enumerate(params):
        z = jnp.dot(h.astype(jnp.bfloat16), w.astype(jnp.bfloat16),
                    preferred_element_type=jnp.float32) + b
        h = jnp.tanh(z) if i < len(params) - 1 else jax.nn.sigmoid(z)
    return h


if __name__ == "__main__":
    key = jax.random.PRNGKey(0)
    k_x, k_p, k_big = jax.random.split(key, 3)
    params = init_params(k_p, N_FEATURES)
    w_stack, b_stack = pack_params(params)          # pre-padded, stacked, bf16 weights

    # Small-batch (latency) path: grid=(1,).
    x = jax.random.uniform(k_x, (BATCH, N_FEATURES), jnp.float32)
    y = jax.block_until_ready(autoencoder_forward(x, w_stack, b_stack))
    assert y.shape == (BATCH, N_FEATURES)
    assert jnp.allclose(y, reference_bf16(x, params), atol=1e-3, rtol=1e-3), \
        "mismatch vs bf16-matched reference"
    assert jnp.allclose(y, reference_f32(x, params), atol=5e-2), \
        "mismatch vs f32 reference"

    # Larger-batch (throughput) path: exercises the batch grid (bt=256, grid=(2,)),
    # weights stay VMEM-resident across grid steps.
    xb = jax.random.uniform(k_big, (512, N_FEATURES), jnp.float32)
    yb = jax.block_until_ready(autoencoder_forward(xb, w_stack, b_stack))
    assert yb.shape == (512, N_FEATURES)
    assert jnp.allclose(yb, reference_bf16(xb, params), atol=1e-3, rtol=1e-3), \
        "mismatch vs bf16-matched reference (batched grid path)"

    print("KERNEL_OK")
</pallas_src>

<mosaic_0001>
module attributes {stable_mosaic.version = 11 : i64} {
  func.func @ae_kernel(%arg0: i32, %arg1: memref<8x64xf32, #tpu.memory_space<vmem>>, %arg2: memref<10x128x128xbf16, #tpu.memory_space<vmem>>, %arg3: memref<10x128xf32, #tpu.memory_space<vmem>>, %arg4: memref<8x64xf32, #tpu.memory_space<vmem>>) attributes {dimension_semantics = [#tpu.dimension_semantics<arbitrary>], iteration_bounds = array<i64: 1>, scalar_prefetch = 0 : i64, scratch_operands = 0 : i64, tpu.core_type = #tpu.core_type<tc>, window_params = [{transform_indices = @transform_0, window_bounds = array<i64: 8, 64>}, {pipeline_mode = #tpu.pipeline_mode<synchronous>, transform_indices = @transform_1, window_bounds = array<i64: 10, 128, 128>}, {pipeline_mode = #tpu.pipeline_mode<synchronous>, transform_indices = @transform_2, window_bounds = array<i64: 10, 128>}, {transform_indices = @transform_3, window_bounds = array<i64: 8, 64>}]} {
    %c0 = arith.constant 0 : index
    %c0_0 = arith.constant 0 : index
    %0 = vector.load %arg1[%c0, %c0_0] : memref<8x64xf32, #tpu.memory_space<vmem>>, vector<8x64xf32>
    %1 = arith.truncf %0 : vector<8x64xf32> to vector<8x64xbf16>
    %c0_1 = arith.constant 0 : index
    %c0_2 = arith.constant 0 : index
    %c0_3 = arith.constant 0 : index
    %2 = vector.load %arg2[%c0_1, %c0_2, %c0_3] : memref<10x128x128xbf16, #tpu.memory_space<vmem>>, vector<1x128x128xbf16>
    %3 = vector.shape_cast %2 : vector<1x128x128xbf16> to vector<128x128xbf16>
    %4 = vector.extract_strided_slice %3 {offsets = [0, 0], sizes = [64, 128], strides = [1, 1]} : vector<128x128xbf16> to vector<64x128xbf16>
    %cst = arith.constant dense<0.000000e+00> : vector<8x128xf32>
    %5 = tpu.matmul %1, %4, %cst {dimension_numbers = #tpu.dot_dimension_numbers<[1], [0], [0], [1], [0, 0, 1, 1], [], []>} : vector<8x64xbf16>, vector<64x128xbf16>, vector<8x128xf32> -> vector<8x128xf32>
    %c0_4 = arith.constant 0 : index
    %c0_5 = arith.constant 0 : index
    %6 = vector.load %arg3[%c0_4, %c0_5] : memref<10x128xf32, #tpu.memory_space<vmem>>, vector<1x128xf32>
    %7 = vector.broadcast %6 : vector<1x128xf32> to vector<8x128xf32>
    %8 = arith.addf %5, %7 : vector<8x128xf32>
    %9 = math.tanh %8 : vector<8x128xf32>
    %10 = arith.truncf %9 : vector<8x128xf32> to vector<8x128xbf16>
    %c1 = arith.constant 1 : index
    %c0_6 = arith.constant 0 : index
    %c0_7 = arith.constant 0 : index
    %11 = vector.load %arg2[%c1, %c0_6, %c0_7] : memref<10x128x128xbf16, #tpu.memory_space<vmem>>, vector<1x128x128xbf16>
    %12 = vector.shape_cast %11 : vector<1x128x128xbf16> to vector<128x128xbf16>
    %cst_8 = arith.constant dense<0.000000e+00> : vector<8x128xf32>
    %13 = tpu.matmul %10, %12, %cst_8 {dimension_numbers = #tpu.dot_dimension_numbers<[1], [0], [0], [1], [0, 0, 1, 1], [], []>} : vector<8x128xbf16>, vector<128x128xbf16>, vector<8x128xf32> -> vector<8x128xf32>
    %c1_9 = arith.constant 1 : index
    %c0_10 = arith.constant 0 : index
    %14 = vector.load %arg3[%c1_9, %c0_10] : memref<10x128xf32, #tpu.memory_space<vmem>>, vector<1x128xf32>
    %15 = vector.broadcast %14 : vector<1x128xf32> to vector<8x128xf32>
    %16 = arith.addf %13, %15 : vector<8x128xf32>
    %17 = math.tanh %16 : vector<8x128xf32>
    %18 = arith.truncf %17 : vector<8x128xf32> to vector<8x128xbf16>
    %c2 = arith.constant 2 : index
    %c0_11 = arith.constant 0 : index
    %c0_12 = arith.constant 0 : index
    %19 = vector.load %arg2[%c2, %c0_11, %c0_12] : memref<10x128x128xbf16, #tpu.memory_space<vmem>>, vector<1x128x128xbf16>
    %20 = vector.shape_cast %19 : vector<1x128x128xbf16> to vector<128x128xbf16>
    %cst_13 = arith.constant dense<0.000000e+00> : vector<8x128xf32>
    %21 = tpu.matmul %18, %20, %cst_13 {dimension_numbers = #tpu.dot_dimension_numbers<[1], [0], [0], [1], [0, 0, 1, 1], [], []>} : vector<8x128xbf16>, vector<128x128xbf16>, vector<8x128xf32> -> vector<8x128xf32>
    %c2_14 = arith.constant 2 : index
    %c0_15 = arith.constant 0 : index
    %22 = vector.load %arg3[%c2_14, %c0_15] : memref<10x128xf32, #tpu.memory_space<vmem>>, vector<1x128xf32>
    %23 = vector.broadcast %22 : vector<1x128xf32> to vector<8x128xf32>
    %24 = arith.addf %21, %23 : vector<8x128xf32>
    %25 = math.tanh %24 : vector<8x128xf32>
    %26 = arith.truncf %25 : vector<8x128xf32> to vector<8x128xbf16>
    %c3 = arith.constant 3 : index
    %c0_16 = arith.constant 0 : index
    %c0_17 = arith.constant 0 : index
    %27 = vector.load %arg2[%c3, %c0_16, %c0_17] : memref<10x128x128xbf16, #tpu.memory_space<vmem>>, vector<1x128x128xbf16>
    %28 = vector.shape_cast %27 : vector<1x128x128xbf16> to vector<128x128xbf16>
    %cst_18 = arith.constant dense<0.000000e+00> : vector<8x128xf32>
    %29 = tpu.matmul %26, %28, %cst_18 {dimension_numbers = #tpu.dot_dimension_numbers<[1], [0], [0], [1], [0, 0, 1, 1], [], []>} : vector<8x128xbf16>, vector<128x128xbf16>, vector<8x128xf32> -> vector<8x128xf32>
    %c3_19 = arith.constant 3 : index
    %c0_20 = arith.constant 0 : index
    %30 = vector.load %arg3[%c3_19, %c0_20] : memref<10x128xf32, #tpu.memory_space<vmem>>, vector<1x128xf32>
    %31 = vector.broadcast %30 : vector<1x128xf32> to vector<8x128xf32>
    %32 = arith.addf %29, %31 : vector<8x128xf32>
    %33 = math.tanh %32 : vector<8x128xf32>
    %34 = arith.truncf %33 : vector<8x128xf32> to vector<8x128xbf16>
    %c4 = arith.constant 4 : index
    %c0_21 = arith.constant 0 : index
    %c0_22 = arith.constant 0 : index
    %35 = vector.load %arg2[%c4, %c0_21, %c0_22] : memref<10x128x128xbf16, #tpu.memory_space<vmem>>, vector<1x128x128xbf16>
    %36 = vector.shape_cast %35 : vector<1x128x128xbf16> to vector<128x128xbf16>
    %cst_23 = arith.constant dense<0.000000e+00> : vector<8x128xf32>
    %37 = tpu.matmul %34, %36, %cst_23 {dimension_numbers = #tpu.dot_dimension_numbers<[1], [0], [0], [1], [0, 0, 1, 1], [], []>} : vector<8x128xbf16>, vector<128x128xbf16>, vector<8x128xf32> -> vector<8x128xf32>
    %c4_24 = arith.constant 4 : index
    %c0_25 = arith.constant 0 : index
    %38 = vector.load %arg3[%c4_24, %c0_25] : memref<10x128xf32, #tpu.memory_space<vmem>>, vector<1x128xf32>
    %39 = vector.broadcast %38 : vector<1x128xf32> to vector<8x128xf32>
    %40 = arith.addf %37, %39 : vector<8x128xf32>
    %41 = math.tanh %40 : vector<8x128xf32>
    %42 = arith.truncf %41 : vector<8x128xf32> to vector<8x128xbf16>
    %c5 = arith.constant 5 : index
    %c0_26 = arith.constant 0 : index
    %c0_27 = arith.constant 0 : index
    %43 = vector.load %arg2[%c5, %c0_26, %c0_27] : memref<10x128x128xbf16, #tpu.memory_space<vmem>>, vector<1x128x128xbf16>
    %44 = vector.shape_cast %43 : vector<1x128x128xbf16> to vector<128x128xbf16>
    %cst_28 = arith.constant dense<0.000000e+00> : vector<8x128xf32>
    %45 = tpu.matmul %42, %44, %cst_28 {dimension_numbers = #tpu.dot_dimension_numbers<[1], [0], [0], [1], [0, 0, 1, 1], [], []>} : vector<8x128xbf16>, vector<128x128xbf16>, vector<8x128xf32> -> vector<8x128xf32>
    %c5_29 = arith.constant 5 : index
    %c0_30 = arith.constant 0 : index
    %46 = vector.load %arg3[%c5_29, %c0_30] : memref<10x128xf32, #tpu.memory_space<vmem>>, vector<1x128xf32>
    %47 = vector.broadcast %46 : vector<1x128xf32> to vector<8x128xf32>
    %48 = arith.addf %45, %47 : vector<8x128xf32>
    %49 = math.tanh %48 : vector<8x128xf32>
    %50 = arith.truncf %49 : vector<8x128xf32> to vector<8x128xbf16>
    %c6 = arith.constant 6 : index
    %c0_31 = arith.constant 0 : index
    %c0_32 = arith.constant 0 : index
    %51 = vector.load %arg2[%c6, %c0_31, %c0_32] : memref<10x128x128xbf16, #tpu.memory_space<vmem>>, vector<1x128x128xbf16>
    %52 = vector.shape_cast %51 : vector<1x128x128xbf16> to vector<128x128xbf16>
    %cst_33 = arith.constant dense<0.000000e+00> : vector<8x128xf32>
    %53 = tpu.matmul %50, %52, %cst_33 {dimension_numbers = #tpu.dot_dimension_numbers<[1], [0], [0], [1], [0, 0, 1, 1], [], []>} : vector<8x128xbf16>, vector<128x128xbf16>, vector<8x128xf32> -> vector<8x128xf32>
    %c6_34 = arith.constant 6 : index
    %c0_35 = arith.constant 0 : index
    %54 = vector.load %arg3[%c6_34, %c0_35] : memref<10x128xf32, #tpu.memory_space<vmem>>, vector<1x128xf32>
    %55 = vector.broadcast %54 : vector<1x128xf32> to vector<8x128xf32>
    %56 = arith.addf %53, %55 : vector<8x128xf32>
    %57 = math.tanh %56 : vector<8x128xf32>
    %58 = arith.truncf %57 : vector<8x128xf32> to vector<8x128xbf16>
    %c7 = arith.constant 7 : index
    %c0_36 = arith.constant 0 : index
    %c0_37 = arith.constant 0 : index
    %59 = vector.load %arg2[%c7, %c0_36, %c0_37] : memref<10x128x128xbf16, #tpu.memory_space<vmem>>, vector<1x128x128xbf16>
    %60 = vector.shape_cast %59 : vector<1x128x128xbf16> to vector<128x128xbf16>
    %cst_38 = arith.constant dense<0.000000e+00> : vector<8x128xf32>
    %61 = tpu.matmul %58, %60, %cst_38 {dimension_numbers = #tpu.dot_dimension_numbers<[1], [0], [0], [1], [0, 0, 1, 1], [], []>} : vector<8x128xbf16>, vector<128x128xbf16>, vector<8x128xf32> -> vector<8x128xf32>
    %c7_39 = arith.constant 7 : index
    %c0_40 = arith.constant 0 : index
    %62 = vector.load %arg3[%c7_39, %c0_40] : memref<10x128xf32, #tpu.memory_space<vmem>>, vector<1x128xf32>
    %63 = vector.broadcast %62 : vector<1x128xf32> to vector<8x128xf32>
    %64 = arith.addf %61, %63 : vector<8x128xf32>
    %65 = math.tanh %64 : vector<8x128xf32>
    %66 = arith.truncf %65 : vector<8x128xf32> to vector<8x128xbf16>
    %c8 = arith.constant 8 : index
    %c0_41 = arith.constant 0 : index
    %c0_42 = arith.constant 0 : index
    %67 = vector.load %arg2[%c8, %c0_41, %c0_42] : memref<10x128x128xbf16, #tpu.memory_space<vmem>>, vector<1x128x128xbf16>
    %68 = vector.shape_cast %67 : vector<1x128x128xbf16> to vector<128x128xbf16>
    %cst_43 = arith.constant dense<0.000000e+00> : vector<8x128xf32>
    %69 = tpu.matmul %66, %68, %cst_43 {dimension_numbers = #tpu.dot_dimension_numbers<[1], [0], [0], [1], [0, 0, 1, 1], [], []>} : vector<8x128xbf16>, vector<128x128xbf16>, vector<8x128xf32> -> vector<8x128xf32>
    %c8_44 = arith.constant 8 : index
    %c0_45 = arith.constant 0 : index
    %70 = vector.load %arg3[%c8_44, %c0_45] : memref<10x128xf32, #tpu.memory_space<vmem>>, vector<1x128xf32>
    %71 = vector.broadcast %70 : vector<1x128xf32> to vector<8x128xf32>
    %72 = arith.addf %69, %71 : vector<8x128xf32>
    %73 = math.tanh %72 : vector<8x128xf32>
    %74 = arith.truncf %73 : vector<8x128xf32> to vector<8x128xbf16>
    %c9 = arith.constant 9 : index
    %c0_46 = arith.constant 0 : index
    %c0_47 = arith.constant 0 : index
    %75 = vector.load %arg2[%c9, %c0_46, %c0_47] : memref<10x128x128xbf16, #tpu.memory_space<vmem>>, vector<1x128x128xbf16>
    %76 = vector.shape_cast %75 : vector<1x128x128xbf16> to vector<128x128xbf16>
    %cst_48 = arith.constant dense<0.000000e+00> : vector<8x128xf32>
    %77 = tpu.matmul %74, %76, %cst_48 {dimension_numbers = #tpu.dot_dimension_numbers<[1], [0], [0], [1], [0, 0, 1, 1], [], []>} : vector<8x128xbf16>, vector<128x128xbf16>, vector<8x128xf32> -> vector<8x128xf32>
    %c9_49 = arith.constant 9 : index
    %c0_50 = arith.constant 0 : index
    %78 = vector.load %arg3[%c9_49, %c0_50] : memref<10x128xf32, #tpu.memory_space<vmem>>, vector<1x128xf32>
    %79 = vector.broadcast %78 : vector<1x128xf32> to vector<8x128xf32>
    %80 = arith.addf %77, %79 : vector<8x128xf32>
    %81 = vector.extract_strided_slice %80 {offsets = [0, 0], sizes = [8, 64], strides = [1, 1]} : vector<8x128xf32> to vector<8x64xf32>
    %82 = arith.negf %81 : vector<8x64xf32>
    %83 = math.exp %82 : vector<8x64xf32>
    %cst_51 = arith.constant 1.000000e+00 : f32
    %84 = vector.broadcast %cst_51 : f32 to vector<8x64xf32>
    %85 = arith.addf %84, %83 : vector<8x64xf32>
    %86 = arith.divf %84, %85 : vector<8x64xf32>
    %c0_52 = arith.constant 0 : index
    %c0_53 = arith.constant 0 : index
    %87 = vector.load %arg4[%c0_52, %c0_53] : memref<8x64xf32, #tpu.memory_space<vmem>>, vector<8x64xf32>
    tpu.vector_store %arg4[%c0_52, %c0_53], %86 {strides = array<i32>} : memref<8x64xf32, #tpu.memory_space<vmem>>, vector<8x64xf32>,
    return
  }
  func.func @transform_0(%arg0: i32) -> (i32, i32) {
    %c0_i32 = arith.constant 0 : i32
    %c0_i32_0 = arith.constant 0 : i32
    return %arg0, %c0_i32 : i32, i32
  }
  func.func @transform_1(%arg0: i32) -> (i32, i32, i32) {
    %c0_i32 = arith.constant 0 : i32
    %c0_i32_0 = arith.constant 0 : i32
    %c0_i32_1 = arith.constant 0 : i32
    %c0_i32_2 = arith.constant 0 : i32
    return %c0_i32, %c0_i32_0, %c0_i32_1 : i32, i32, i32
  }
  func.func @transform_2(%arg0: i32) -> (i32, i32) {
    %c0_i32 = arith.constant 0 : i32
    %c0_i32_0 = arith.constant 0 : i32
    %c0_i32_1 = arith.constant 0 : i32
    return %c0_i32, %c0_i32_0 : i32, i32
  }
  func.func @transform_3(%arg0: i32) -> (i32, i32) {
    %c0_i32 = arith.constant 0 : i32
    %c0_i32_0 = arith.constant 0 : i32
    return %arg0, %c0_i32 : i32, i32
  }
}

</mosaic_0001>

<llo_original>
// kernel: autoencoder_forward.1
$region0: #{autoencoder_forward.1}
  #allocation0 [shape = 'u32[]', space=smem, size = 0x4, offset = 0x4, fixed_abs, tag = 'smem constant byte address 0x4 - core index']
  #allocation1 [shape = 'u32[144,128]{1,0:T(1,128)}', space=vmem, size = 0x12000, scoped, tag = 'internal scratch']
  %s0 = inlined_call_operand.hbm [shape: f32[8,64], index: 0, kind: input, shape index: {}]
  %s1 = inlined_call_operand.hbm [shape: bf16[10,128,128], index: 1, kind: input, shape index: {}]
  %s2 = inlined_call_operand.hbm [shape: f32[10,128], index: 2, kind: input, shape index: {}]
  %s3 = inlined_call_operand.hbm [shape: f32[8,64], index: 3, kind: output, shape index: {}]
  %s4 = sld [smem:[#allocation0]]
  $region34: #{autoencoder_forward.1} parent=0
    _
  %s6 = ssub.s32 1, %s4
  %s7 = scalar_select 0, %s6, %s4
  $region1: #{autoencoder_forward.1} parent=0
    #allocation2 [shape = 'u8[4096]{0}', space=vmem, size = 0x1000, scoped, tag = 'input window, operand 0, single buffered']
    #allocation3 [shape = 's32[1]{0}', space=sflag, size = 0x4, scoped, tag = 'scoped memory for autoencoder_forward.1']
    #allocation4 [shape = 's32[1]{0}', space=sflag, size = 0x4, scoped, tag = 'scoped memory for autoencoder_forward.1']
    #allocation5 [shape = 'u8[327680]{0}', space=vmem, size = 0x50000, scoped, tag = 'input window, operand 1, single buffered']
    #allocation6 [shape = 's32[1]{0}', space=sflag, size = 0x4, scoped, tag = 'scoped memory for autoencoder_forward.1']
    #allocation7 [shape = 'u8[8192]{0}', space=vmem, size = 0x2000, scoped, tag = 'input window, operand 2, single buffered']
    #allocation8 [shape = 'u8[4096]{0}', space=vmem, size = 0x1000, scoped, tag = 'output window, operand 0, single buffered']
    %8 = vsyncpa [#allocation3], 0
    %9 = vsyncpa [#allocation6], 0
    %10 = vsyncpa [#allocation4], 0
    // Predicated region
    $region2: #{autoencoder_forward.1} parent=1 // pred_check
      _
    $region3: #{autoencoder_forward.1} parent=1 // pred_check_branch
      %12 = sbr.rel (0) target = $region5
    $region4: #{autoencoder_forward.1} parent=1 // pred_region
      %s14 = ssub.s32 128, 128
      %15 = vsyncadd [#allocation3], %s14
      %s17 = sshll.u32 [#allocation2], 4
      %s18 = int_to_ptr.vmem [resolvable:$true] %s17
      %20 = dma.hbm_to_vmem [thread:$0]  %s0, 128, %s18, [#allocation3]
    $region5: #{autoencoder_forward.1} parent=1 // pred_fallthru
      _
    // Predicated region
    $region6: #{autoencoder_forward.1} parent=1 // pred_check
      _
    $region7: #{autoencoder_forward.1} parent=1 // pred_check_branch
      %22 = sbr.rel (0) target = $region9
    $region8: #{autoencoder_forward.1} parent=1 // pred_region
      %s24 = ssub.s32 10240, 10240
      %25 = vsyncadd [#allocation6], %s24
      %s26 = sshll.u32 [#allocation5], 4
      %s27 = int_to_ptr.vmem [resolvable:$true] %s26
      %32 = dma.hbm_to_vmem [thread:$0]  %s1, 10240, %s27, [#allocation6], 64, 64, 4
    $region9: #{autoencoder_forward.1} parent=1 // pred_fallthru
      _
    // Predicated region
    $region10: #{autoencoder_forward.1} parent=1 // pred_check
      _
    $region11: #{autoencoder_forward.1} parent=1 // pred_check_branch
      %34 = sbr.rel (0) target = $region13
    $region12: #{autoencoder_forward.1} parent=1 // pred_region
      %s36 = ssub.s32 256, 256
      %37 = vsyncadd [#allocation6], %s36
      %s38 = sshll.u32 [#allocation7], 4
      %s39 = int_to_ptr.vmem [resolvable:$true] %s38
      %44 = dma.hbm_to_vmem [thread:$0]  %s2, 256, %s39, [#allocation6], 128, 128, 8
    $region13: #{autoencoder_forward.1} parent=1 // pred_fallthru
      _
    // Predicated region
    $region14: #{autoencoder_forward.1} parent=1 // pred_check
      _
    $region15: #{autoencoder_forward.1} parent=1 // pred_check_branch
      %46 = sbr.rel (0) target = $region17
    $region16: #{autoencoder_forward.1} parent=1 // pred_region
      %47 = dma.done [#allocation3], 128
    $region17: #{autoencoder_forward.1} parent=1 // pred_fallthru
      _
    // Predicated region
    $region18: #{autoencoder_forward.1} parent=1 // pred_check
      _
    $region19: #{autoencoder_forward.1} parent=1 // pred_check_branch
      %49 = sbr.rel (0) target = $region21
    $region20: #{autoencoder_forward.1} parent=1 // pred_region
      %50 = dma.done [#allocation6], 10240
    $region21: #{autoencoder_forward.1} parent=1 // pred_fallthru
      _
    // Predicated region
    $region22: #{autoencoder_forward.1} parent=1 // pred_check
      _
    $region23: #{autoencoder_forward.1} parent=1 // pred_check_branch
      %52 = sbr.rel (0) target = $region25
    $region24: #{autoencoder_forward.1} parent=1 // pred_region
      %53 = dma.done [#allocation6], 256
    $region25: #{autoencoder_forward.1} parent=1 // pred_fallthru
      _
    %v55 = vld [vmem:[#allocation2] sm:$0xff]
    %v56 = vpack.c.bf16 %v55, %v55
    %v57 = vld [vmem:[#allocation5] sm:$0xf]
    %v58 = vld [vmem:[#allocation5 + $0x4] sm:$0xf]
    %v59 = vld [vmem:[#allocation5 + $0x8] sm:$0xf]
    %v60 = vld [vmem:[#allocation5 + $0xc] sm:$0xf]
    %v61 = vld [vmem:[#allocation5 + $0x10] sm:$0xf]
    %v62 = vld [vmem:[#allocation5 + $0x14] sm:$0xf]
    %v63 = vld [vmem:[#allocation5 + $0x18] sm:$0xf]
    %v64 = vld [vmem:[#allocation5 + $0x1c] sm:$0xf]
    %v65 = vld [vmem:[#allocation7] sm:$0x1]
    %v66 = vlaneseq
    %v67 = vshrl.u32 %v66, 7
    %v68 = vsub.s32 0, %v67
    %v69 = vrot.slane %v65, %v68
    %v78 = vunpack.c.l.b16 %v57
    %v79 = vunpack.c.l.b16 %v58
    %v80 = vunpack.c.l.b16 %v59
    %v81 = vunpack.c.l.b16 %v60
    %v82 = vunpack.c.l.b16 %v61
    %v83 = vunpack.c.l.b16 %v62
    %v84 = vunpack.c.l.b16 %v63
    %v85 = vunpack.c.l.b16 %v64
    %v86 = vpack.c.b16 %v79, %v78
    %v87 = vpack.c.b16 %v81, %v80
    %v88 = vpack.c.b16 %v83, %v82
    %v89 = vpack.c.b16 %v85, %v84
    %vm94 = vcmask 523264
    %v96 = vsel %vm94, %v56, 0
    %98 = vmatprep.subr.bf16.mxu0 0
    %99 = vmatpush1.bf16.msra.mxu0 %v86
    %100 = vmatprep.subr.bf16.mxu0 0
    %101 = vmatpush1.bf16.msra.mxu0 %v87
    %102 = vmatprep.subr.bf16.mxu0 0
    %103 = vmatpush1.bf16.msra.mxu0 %v88
    %104 = vmatprep.subr.bf16.mxu0 0
    %105 = vmatpush1.bf16.msra.mxu0 %v89
    %106 = vmatprep.subr.bf16.mxu0 0
    %107 = vmatpush1.bf16.msra.mxu0 0
    %108 = vmatprep.subr.bf16.mxu0 0
    %109 = vmatpush1.bf16.msra.mxu0 0
    %110 = vmatprep.subr.bf16.mxu0 0
    %111 = vmatpush1.bf16.msra.mxu0 0
    %112 = vmatprep.subr.bf16.mxu0 0
    %113 = vmatpush1.bf16.msra.mxu0 0
    %114 = vmatprep.subr.bf16.mxu0 0
    %115 = vmatpush1.bf16.msra.mxu0 0
    %116 = vmatprep.subr.bf16.mxu0 0
    %117 = vmatpush1.bf16.msra.mxu0 0
    %118 = vmatprep.subr.bf16.mxu0 0
    %119 = vmatpush1.bf16.msra.mxu0 0
    %120 = vmatprep.subr.bf16.mxu0 0
    %121 = vmatpush1.bf16.msra.mxu0 0
    %122 = vmatprep.subr.bf16.mxu0 0
    %123 = vmatpush1.bf16.msra.mxu0 0
    %124 = vmatprep.subr.bf16.mxu0 0
    %125 = vmatpush1.bf16.msra.mxu0 0
    %126 = vmatprep.subr.bf16.mxu0 0
    %127 = vmatpush1.bf16.msra.mxu0 0
    %128 = vmatprep.subr.bf16.mxu0 0
    %129 = vmatpush1.bf16.msra.mxu0 0
    %130 = vmatprep.mubr.bf16.mxu0 0
    %131 = vmatmul.mubr.bf16.gmra.mrb[0].mxu0 %v96
    %v132 = vpop.f32.mrb[0].mxu0
    %v133 = vadd.f32 %v69, %v132
    %v134 = vpop.f32.mrb[0].mxu0
    %v135 = vpop.f32.mrb[0].mxu0
    %v136 = vpop.f32.mrb[0].mxu0
    %137 = vdwg.mxu0
    %v138 = vtanh.pop %v133
    %v139 = vpack.c.bf16 %v138, %v138
    %s140 = scalar_lea.vmem [#allocation5], 64
    %v141 = vld [vmem:[%s140] sm:$0xf]
    %v142 = vld [vmem:[%s140 + $0x4] sm:$0xf]
    %v143 = vld [vmem:[%s140 + $0x8] sm:$0xf]
    %v144 = vld [vmem:[%s140 + $0xc] sm:$0xf]
    %v145 = vld [vmem:[%s140 + $0x10] sm:$0xf]
    %v146 = vld [vmem:[%s140 + $0x14] sm:$0xf]
    %v147 = vld [vmem:[%s140 + $0x18] sm:$0xf]
    %v148 = vld [vmem:[%s140 + $0x1c] sm:$0xf]
    %v149 = vld [vmem:[%s140 + $0x20] sm:$0xf]
    %v150 = vld [vmem:[%s140 + $0x24] sm:$0xf]
    %v151 = vld [vmem:[%s140 + $0x28] sm:$0xf]
    %v152 = vld [vmem:[%s140 + $0x2c] sm:$0xf]
    %v153 = vld [vmem:[%s140 + $0x30] sm:$0xf]
    %v154 = vld [vmem:[%s140 + $0x34] sm:$0xf]
    %v155 = vld [vmem:[%s140 + $0x38] sm:$0xf]
    %v156 = vld [vmem:[%s140 + $0x3c] sm:$0xf]
    %v157 = vld [vmem:[#allocation7 + $0x1] sm:$0x1]
    %v158 = vlaneseq
    %v159 = vshrl.u32 %v158, 7
    %v160 = vsub.s32 0, %v159
    %v161 = vrot.slane %v157, %v160
    %v178 = vunpack.c.l.b16 %v141
    %v179 = vunpack.c.l.b16 %v142
    %v180 = vunpack.c.l.b16 %v143
    %v181 = vunpack.c.l.b16 %v144
    %v182 = vunpack.c.l.b16 %v145
    %v183 = vunpack.c.l.b16 %v146
    %v184 = vunpack.c.l.b16 %v147
    %v185 = vunpack.c.l.b16 %v148
    %v186 = vunpack.c.l.b16 %v149
    %v187 = vunpack.c.l.b16 %v150
    %v188 = vunpack.c.l.b16 %v151
    %v189 = vunpack.c.l.b16 %v152
    %v190 = vunpack.c.l.b16 %v153
    %v191 = vunpack.c.l.b16 %v154
    %v192 = vunpack.c.l.b16 %v155
    %v193 = vunpack.c.l.b16 %v156
    %v194 = vpack.c.b16 %v179, %v178
    %v195 = vpack.c.b16 %v181, %v180
    %v196 = vpack.c.b16 %v183, %v182
    %v197 = vpack.c.b16 %v185, %v184
    %v198 = vpack.c.b16 %v187, %v186
    %v199 = vpack.c.b16 %v189, %v188
    %v200 = vpack.c.b16 %v191, %v190
    %v201 = vpack.c.b16 %v193, %v192
    %210 = vmatprep.subr.bf16.mxu0 0
    %211 = vmatpush1.bf16.msra.mxu0 %v194
    %212 = vmatprep.subr.bf16.mxu0 0
    %213 = vmatpush1.bf16.msra.mxu0 %v195
    %214 = vmatprep.subr.bf16.mxu0 0
    %215 = vmatpush1.bf16.msra.mxu0 %v196
    %216 = vmatprep.subr.bf16.mxu0 0
    %217 = vmatpush1.bf16.msra.mxu0 %v197
    %218 = vmatprep.subr.bf16.mxu0 0
    %219 = vmatpush1.bf16.msra.mxu0 %v198
    %220 = vmatprep.subr.bf16.mxu0 0
    %221 = vmatpush1.bf16.msra.mxu0 %v199
    %222 = vmatprep.subr.bf16.mxu0 0
    %223 = vmatpush1.bf16.msra.mxu0 %v200
    %224 = vmatprep.subr.bf16.mxu0 0
    %225 = vmatpush1.bf16.msra.mxu0 %v201
    %226 = vmatprep.subr.bf16.mxu0 0
    %227 = vmatpush1.bf16.msra.mxu0 0
    %228 = vmatprep.subr.bf16.mxu0 0
    %229 = vmatpush1.bf16.msra.mxu0 0
    %230 = vmatprep.subr.bf16.mxu0 0
    %231 = vmatpush1.bf16.msra.mxu0 0
    %232 = vmatprep.subr.bf16.mxu0 0
    %233 = vmatpush1.bf16.msra.mxu0 0
    %234 = vmatprep.subr.bf16.mxu0 0
    %235 = vmatpush1.bf16.msra.mxu0 0
    %236 = vmatprep.subr.bf16.mxu0 0
    %237 = vmatpush1.bf16.msra.mxu0 0
    %238 = vmatprep.subr.bf16.mxu0 0
    %239 = vmatpush1.bf16.msra.mxu0 0
    %240 = vmatprep.subr.bf16.mxu0 0
    %241 = vmatpush1.bf16.msra.mxu0 0
    %242 = vmatprep.mubr.bf16.mxu0 0
    %243 = vmatmul.mubr.bf16.gmra.mrb[0].mxu0 %v139
    %v244 = vpop.f32.mrb[0].mxu0
    %v245 = vadd.f32 %v161, %v244
    %v246 = vpop.f32.mrb[0].mxu0
    %v247 = vpop.f32.mrb[0].mxu0
    %v248 = vpop.f32.mrb[0].mxu0
    %249 = vdwg.mxu0
    %v250 = vtanh.pop %v245
    %v251 = vpack.c.bf16 %v250, %v250
    %s252 = scalar_lea.vmem [#allocation5], 128
    %v253 = vld [vmem:[%s252] sm:$0xf]
    %v254 = vld [vmem:[%s252 + $0x4] sm:$0xf]
    %v255 = vld [vmem:[%s252 + $0x8] sm:$0xf]
    %v256 = vld [vmem:[%s252 + $0xc] sm:$0xf]
    %v257 = vld [vmem:[%s252 + $0x10] sm:$0xf]
    %v258 = vld [vmem:[%s252 + $0x14] sm:$0xf]
    %v259 = vld [vmem:[%s252 + $0x18] sm:$0xf]
    %v260 = vld [vmem:[%s252 + $0x1c] sm:$0xf]
    %v261 = vld [vmem:[%s252 + $0x20] sm:$0xf]
    %v262 = vld [vmem:[%s252 + $0x24] sm:$0xf]
    %v263 = vld [vmem:[%s252 + $0x28] sm:$0xf]
    %v264 = vld [vmem:[%s252 + $0x2c] sm:$0xf]
    %v265 = vld [vmem:[%s252 + $0x30] sm:$0xf]
    %v266 = vld [vmem:[%s252 + $0x34] sm:$0xf]
    %v267 = vld [vmem:[%s252 + $0x38] sm:$0xf]
    %v268 = vld [vmem:[%s252 + $0x3c] sm:$0xf]
    %v269 = vld [vmem:[#allocation7 + $0x2] sm:$0x1]
    %v270 = vlaneseq
    %v271 = vshrl.u32 %v270, 7
    %v272 = vsub.s32 0, %v271
    %v273 = vrot.slane %v269, %v272
    %v290 = vunpack.c.l.b16 %v253
    %v291 = vunpack.c.l.b16 %v254
    %v292 = vunpack.c.l.b16 %v255
    %v293 = vunpack.c.l.b16 %v256
    %v294 = vunpack.c.l.b16 %v257
    %v295 = vunpack.c.l.b16 %v258
    %v296 = vunpack.c.l.b16 %v259
    %v297 = vunpack.c.l.b16 %v260
    %v298 = vunpack.c.l.b16 %v261
    %v299 = vunpack.c.l.b16 %v262
    %v300 = vunpack.c.l.b16 %v263
    %v301 = vunpack.c.l.b16 %v264
    %v302 = vunpack.c.l.b16 %v265
    %v303 = vunpack.c.l.b16 %v266
    %v304 = vunpack.c.l.b16 %v267
    %v305 = vunpack.c.l.b16 %v268
    %v306 = vpack.c.b16 %v291, %v290
    %v307 = vpack.c.b16 %v293, %v292
    %v308 = vpack.c.b16 %v295, %v294
    %v309 = vpack.c.b16 %v297, %v296
    %v310 = vpack.c.b16 %v299, %v298
    %v311 = vpack.c.b16 %v301, %v300
    %v312 = vpack.c.b16 %v303, %v302
    %v313 = vpack.c.b16 %v305, %v304
    %322 = vmatprep.subr.bf16.mxu0 0
    %323 = vmatpush1.bf16.msra.mxu0 %v306
    %324 = vmatprep.subr.bf16.mxu0 0
    %325 = vmatpush1.bf16.msra.mxu0 %v307
    %326 = vmatprep.subr.bf16.mxu0 0
    %327 = vmatpush1.bf16.msra.mxu0 %v308
    %328 = vmatprep.subr.bf16.mxu0 0
    %329 = vmatpush1.bf16.msra.mxu0 %v309
    %330 = vmatprep.subr.bf16.mxu0 0
    %331 = vmatpush1.bf16.msra.mxu0 %v310
    %332 = vmatprep.subr.bf16.mxu0 0
    %333 = vmatpush1.bf16.msra.mxu0 %v311
    %334 = vmatprep.subr.bf16.mxu0 0
    %335 = vmatpush1.bf16.msra.mxu0 %v312
    %336 = vmatprep.subr.bf16.mxu0 0
    %337 = vmatpush1.bf16.msra.mxu0 %v313
    %338 = vmatprep.subr.bf16.mxu0 0
    %339 = vmatpush1.bf16.msra.mxu0 0
    %340 = vmatprep.subr.bf16.mxu0 0
    %341 = vmatpush1.bf16.msra.mxu0 0
    %342 = vmatprep.subr.bf16.mxu0 0
    %343 = vmatpush1.bf16.msra.mxu0 0
    %344 = vmatprep.subr.bf16.mxu0 0
    %345 = vmatpush1.bf16.msra.mxu0 0
    %346 = vmatprep.subr.bf16.mxu0 0
    %347 = vmatpush1.bf16.msra.mxu0 0
    %348 = vmatprep.subr.bf16.mxu0 0
    %349 = vmatpush1.bf16.msra.mxu0 0
    %350 = vmatprep.subr.bf16.mxu0 0
    %351 = vmatpush1.bf16.msra.mxu0 0
    %352 = vmatprep.subr.bf16.mxu0 0
    %353 = vmatpush1.bf16.msra.mxu0 0
    %354 = vmatprep.mubr.bf16.mxu0 0
    %355 = vmatmul.mubr.bf16.gmra.mrb[0].mxu0 %v251
    %v356 = vpop.f32.mrb[0].mxu0
    %v357 = vadd.f32 %v273, %v356
    %v358 = vpop.f32.mrb[0].mxu0
    %v359 = vpop.f32.mrb[0].mxu0
    %v360 = vpop.f32.mrb[0].mxu0
    %361 = vdwg.mxu0
    %v362 = vtanh.pop %v357
    %v363 = vpack.c.bf16 %v362, %v362
    %s364 = scalar_lea.vmem [#allocation5], 192
    %v365 = vld [vmem:[%s364] sm:$0xf]
    %v366 = vld [vmem:[%s364 + $0x4] sm:$0xf]
    %v367 = vld [vmem:[%s364 + $0x8] sm:$0xf]
    %v368 = vld [vmem:[%s364 + $0xc] sm:$0xf]
    %v369 = vld [vmem:[%s364 + $0x10] sm:$0xf]
    %v370 = vld [vmem:[%s364 + $0x14] sm:$0xf]
    %v371 = vld [vmem:[%s364 + $0x18] sm:$0xf]
    %v372 = vld [vmem:[%s364 + $0x1c] sm:$0xf]
    %v373 = vld [vmem:[%s364 + $0x20] sm:$0xf]
    %v374 = vld [vmem:[%s364 + $0x24] sm:$0xf]
    %v375 = vld [vmem:[%s364 + $0x28] sm:$0xf]
    %v376 = vld [vmem:[%s364 + $0x2c] sm:$0xf]
    %v377 = vld [vmem:[%s364 + $0x30] sm:$0xf]
    %v378 = vld [vmem:[%s364 + $0x34] sm:$0xf]
    %v379 = vld [vmem:[%s364 + $0x38] sm:$0xf]
    %v380 = vld [vmem:[%s364 + $0x3c] sm:$0xf]
    %v381 = vld [vmem:[#allocation7 + $0x3] sm:$0x1]
    %v382 = vlaneseq
    %v383 = vshrl.u32 %v382, 7
    %v384 = vsub.s32 0, %v383
    %v385 = vrot.slane %v381, %v384
    %v402 = vunpack.c.l.b16 %v365
    %v403 = vunpack.c.l.b16 %v366
    %v404 = vunpack.c.l.b16 %v367
    %v405 = vunpack.c.l.b16 %v368
    %v406 = vunpack.c.l.b16 %v369
    %v407 = vunpack.c.l.b16 %v370
    %v408 = vunpack.c.l.b16 %v371
    %v409 = vunpack.c.l.b16 %v372
    %v410 = vunpack.c.l.b16 %v373
    %v411 = vunpack.c.l.b16 %v374
    %v412 = vunpack.c.l.b16 %v375
    %v413 = vunpack.c.l.b16 %v376
    %v414 = vunpack.c.l.b16 %v377
    %v415 = vunpack.c.l.b16 %v378
    %v416 = vunpack.c.l.b16 %v379
    %v417 = vunpack.c.l.b16 %v380
    %v418 = vpack.c.b16 %v403, %v402
    %v419 = vpack.c.b16 %v405, %v404
    %v420 = vpack.c.b16 %v407, %v406
    %v421 = vpack.c.b16 %v409, %v408
    %v422 = vpack.c.b16 %v411, %v410
    %v423 = vpack.c.b16 %v413, %v412
    %v424 = vpack.c.b16 %v415, %v414
    %v425 = vpack.c.b16 %v417, %v416
    %434 = vmatprep.subr.bf16.mxu0 0
    %435 = vmatpush1.bf16.msra.mxu0 %v418
    %436 = vmatprep.subr.bf16.mxu0 0
    %437 = vmatpush1.bf16.msra.mxu0 %v419
    %438 = vmatprep.subr.bf16.mxu0 0
    %439 = vmatpush1.bf16.msra.mxu0 %v420
    %440 = vmatprep.subr.bf16.mxu0 0
    %441 = vmatpush1.bf16.msra.mxu0 %v421
    %442 = vmatprep.subr.bf16.mxu0 0
    %443 = vmatpush1.bf16.msra.mxu0 %v422
    %444 = vmatprep.subr.bf16.mxu0 0
    %445 = vmatpush1.bf16.msra.mxu0 %v423
    %446 = vmatprep.subr.bf16.mxu0 0
    %447 = vmatpush1.bf16.msra.mxu0 %v424
    %448 = vmatprep.subr.bf16.mxu0 0
    %449 = vmatpush1.bf16.msra.mxu0 %v425
    %450 = vmatprep.subr.bf16.mxu0 0
    %451 = vmatpush1.bf16.msra.mxu0 0
    %452 = vmatprep.subr.bf16.mxu0 0
    %453 = vmatpush1.bf16.msra.mxu0 0
    %454 = vmatprep.subr.bf16.mxu0 0
    %455 = vmatpush1.bf16.msra.mxu0 0
    %456 = vmatprep.subr.bf16.mxu0 0
    %457 = vmatpush1.bf16.msra.mxu0 0
    %458 = vmatprep.subr.bf16.mxu0 0
    %459 = vmatpush1.bf16.msra.mxu0 0
    %460 = vmatprep.subr.bf16.mxu0 0
    %461 = vmatpush1.bf16.msra.mxu0 0
    %462 = vmatprep.subr.bf16.mxu0 0
    %463 = vmatpush1.bf16.msra.mxu0 0
    %464 = vmatprep.subr.bf16.mxu0 0
    %465 = vmatpush1.bf16.msra.mxu0 0
    %466 = vmatprep.mubr.bf16.mxu0 0
    %467 = vmatmul.mubr.bf16.gmra.mrb[0].mxu0 %v363
    %v468 = vpop.f32.mrb[0].mxu0
    %v469 = vadd.f32 %v385, %v468
    %v470 = vpop.f32.mrb[0].mxu0
    %v471 = vpop.f32.mrb[0].mxu0
    %v472 = vpop.f32.mrb[0].mxu0
    %473 = vdwg.mxu0
    %v474 = vtanh.pop %v469
    %v475 = vpack.c.bf16 %v474, %v474
    %s476 = scalar_lea.vmem [#allocation5], 256
    %v477 = vld [vmem:[%s476] sm:$0xf]
    %v478 = vld [vmem:[%s476 + $0x4] sm:$0xf]
    %v479 = vld [vmem:[%s476 + $0x8] sm:$0xf]
    %v480 = vld [vmem:[%s476 + $0xc] sm:$0xf]
    %v481 = vld [vmem:[%s476 + $0x10] sm:$0xf]
    %v482 = vld [vmem:[%s476 + $0x14] sm:$0xf]
    %v483 = vld [vmem:[%s476 + $0x18] sm:$0xf]
    %v484 = vld [vmem:[%s476 + $0x1c] sm:$0xf]
    %v485 = vld [vmem:[%s476 + $0x20] sm:$0xf]
    %v486 = vld [vmem:[%s476 + $0x24] sm:$0xf]
    %v487 = vld [vmem:[%s476 + $0x28] sm:$0xf]
    %v488 = vld [vmem:[%s476 + $0x2c] sm:$0xf]
    %v489 = vld [vmem:[%s476 + $0x30] sm:$0xf]
    %v490 = vld [vmem:[%s476 + $0x34] sm:$0xf]
    %v491 = vld [vmem:[%s476 + $0x38] sm:$0xf]
    %v492 = vld [vmem:[%s476 + $0x3c] sm:$0xf]
    %v493 = vld [vmem:[#allocation7 + $0x4] sm:$0x1]
    %v494 = vlaneseq
    %v495 = vshrl.u32 %v494, 7
    %v496 = vsub.s32 0, %v495
    %v497 = vrot.slane %v493, %v496
    %v514 = vunpack.c.l.b16 %v477
    %v515 = vunpack.c.l.b16 %v478
    %v516 = vunpack.c.l.b16 %v479
    %v517 = vunpack.c.l.b16 %v480
    %v518 = vunpack.c.l.b16 %v481
    %v519 = vunpack.c.l.b16 %v482
    %v520 = vunpack.c.l.b16 %v483
    %v521 = vunpack.c.l.b16 %v484
    %v522 = vunpack.c.l.b16 %v485
    %v523 = vunpack.c.l.b16 %v486
    %v524 = vunpack.c.l.b16 %v487
    %v525 = vunpack.c.l.b16 %v488
    %v526 = vunpack.c.l.b16 %v489
    %v527 = vunpack.c.l.b16 %v490
    %v528 = vunpack.c.l.b16 %v491
    %v529 = vunpack.c.l.b16 %v492
    %v530 = vpack.c.b16 %v515, %v514
    %v531 = vpack.c.b16 %v517, %v516
    %v532 = vpack.c.b16 %v519, %v518
    %v533 = vpack.c.b16 %v521, %v520
    %v534 = vpack.c.b16 %v523, %v522
    %v535 = vpack.c.b16 %v525, %v524
    %v536 = vpack.c.b16 %v527, %v526
    %v537 = vpack.c.b16 %v529, %v528
    %546 = vmatprep.subr.bf16.mxu0 0
    %547 = vmatpush1.bf16.msra.mxu0 %v530
    %548 = vmatprep.subr.bf16.mxu0 0
    %549 = vmatpush1.bf16.msra.mxu0 %v531
    %550 = vmatprep.subr.bf16.mxu0 0
    %551 = vmatpush1.bf16.msra.mxu0 %v532
    %552 = vmatprep.subr.bf16.mxu0 0
    %553 = vmatpush1.bf16.msra.mxu0 %v533
    %554 = vmatprep.subr.bf16.mxu0 0
    %555 = vmatpush1.bf16.msra.mxu0 %v534
    %556 = vmatprep.subr.bf16.mxu0 0
    %557 = vmatpush1.bf16.msra.mxu0 %v535
    %558 = vmatprep.subr.bf16.mxu0 0
    %559 = vmatpush1.bf16.msra.mxu0 %v536
    %560 = vmatprep.subr.bf16.mxu0 0
    %561 = vmatpush1.bf16.msra.mxu0 %v537
    %562 = vmatprep.subr.bf16.mxu0 0
    %563 = vmatpush1.bf16.msra.mxu0 0
    %564 = vmatprep.subr.bf16.mxu0 0
    %565 = vmatpush1.bf16.msra.mxu0 0
    %566 = vmatprep.subr.bf16.mxu0 0
    %567 = vmatpush1.bf16.msra.mxu0 0
    %568 = vmatprep.subr.bf16.mxu0 0
    %569 = vmatpush1.bf16.msra.mxu0 0
    %570 = vmatprep.subr.bf16.mxu0 0
    %571 = vmatpush1.bf16.msra.mxu0 0
    %572 = vmatprep.subr.bf16.mxu0 0
    %573 = vmatpush1.bf16.msra.mxu0 0
    %574 = vmatprep.subr.bf16.mxu0 0
    %575 = vmatpush1.bf16.msra.mxu0 0
    %576 = vmatprep.subr.bf16.mxu0 0
    %577 = vmatpush1.bf16.msra.mxu0 0
    %578 = vmatprep.mubr.bf16.mxu0 0
    %579 = vmatmul.mubr.bf16.gmra.mrb[0].mxu0 %v475
    %v580 = vpop.f32.mrb[0].mxu0
    %v581 = vadd.f32 %v497, %v580
    %v582 = vpop.f32.mrb[0].mxu0
    %v583 = vpop.f32.mrb[0].mxu0
    %v584 = vpop.f32.mrb[0].mxu0
    %585 = vdwg.mxu0
    %v586 = vtanh.pop %v581
    %v587 = vpack.c.bf16 %v586, %v586
    %s588 = scalar_lea.vmem [#allocation5], 320
    %v589 = vld [vmem:[%s588] sm:$0xf]
    %v590 = vld [vmem:[%s588 + $0x4] sm:$0xf]
    %v591 = vld [vmem:[%s588 + $0x8] sm:$0xf]
    %v592 = vld [vmem:[%s588 + $0xc] sm:$0xf]
    %v593 = vld [vmem:[%s588 + $0x10] sm:$0xf]
    %v594 = vld [vmem:[%s588 + $0x14] sm:$0xf]
    %v595 = vld [vmem:[%s588 + $0x18] sm:$0xf]
    %v596 = vld [vmem:[%s588 + $0x1c] sm:$0xf]
    %v597 = vld [vmem:[%s588 + $0x20] sm:$0xf]
    %v598 = vld [vmem:[%s588 + $0x24] sm:$0xf]
    %v599 = vld [vmem:[%s588 + $0x28] sm:$0xf]
    %v600 = vld [vmem:[%s588 + $0x2c] sm:$0xf]
    %v601 = vld [vmem:[%s588 + $0x30] sm:$0xf]
    %v602 = vld [vmem:[%s588 + $0x34] sm:$0xf]
    %v603 = vld [vmem:[%s588 + $0x38] sm:$0xf]
    %v604 = vld [vmem:[%s588 + $0x3c] sm:$0xf]
    %v605 = vld [vmem:[#allocation7 + $0x5] sm:$0x1]
    %v606 = vlaneseq
    %v607 = vshrl.u32 %v606, 7
    %v608 = vsub.s32 0, %v607
    %v609 = vrot.slane %v605, %v608
    %v626 = vunpack.c.l.b16 %v589
    %v627 = vunpack.c.l.b16 %v590
    %v628 = vunpack.c.l.b16 %v591
    %v629 = vunpack.c.l.b16 %v592
    %v630 = vunpack.c.l.b16 %v593
    %v631 = vunpack.c.l.b16 %v594
    %v632 = vunpack.c.l.b16 %v595
    %v633 = vunpack.c.l.b16 %v596
    %v634 = vunpack.c.l.b16 %v597
    %v635 = vunpack.c.l.b16 %v598
    %v636 = vunpack.c.l.b16 %v599
    %v637 = vunpack.c.l.b16 %v600
    %v638 = vunpack.c.l.b16 %v601
    %v639 = vunpack.c.l.b16 %v602
    %v640 = vunpack.c.l.b16 %v603
    %v641 = vunpack.c.l.b16 %v604
    %v642 = vpack.c.b16 %v627, %v626
    %v643 = vpack.c.b16 %v629, %v628
    %v644 = vpack.c.b16 %v631, %v630
    %v645 = vpack.c.b16 %v633, %v632
    %v646 = vpack.c.b16 %v635, %v634
    %v647 = vpack.c.b16 %v637, %v636
    %v648 = vpack.c.b16 %v639, %v638
    %v649 = vpack.c.b16 %v641, %v640
    %658 = vmatprep.subr.bf16.mxu0 0
    %659 = vmatpush1.bf16.msra.mxu0 %v642
    %660 = vmatprep.subr.bf16.mxu0 0
    %661 = vmatpush1.bf16.msra.mxu0 %v643
    %662 = vmatprep.subr.bf16.mxu0 0
    %663 = vmatpush1.bf16.msra.mxu0 %v644
    %664 = vmatprep.subr.bf16.mxu0 0
    %665 = vmatpush1.bf16.msra.mxu0 %v645
    %666 = vmatprep.subr.bf16.mxu0 0
    %667 = vmatpush1.bf16.msra.mxu0 %v646
    %668 = vmatprep.subr.bf16.mxu0 0
    %669 = vmatpush1.bf16.msra.mxu0 %v647
    %670 = vmatprep.subr.bf16.mxu0 0
    %671 = vmatpush1.bf16.msra.mxu0 %v648
    %672 = vmatprep.subr.bf16.mxu0 0
    %673 = vmatpush1.bf16.msra.mxu0 %v649
    %674 = vmatprep.subr.bf16.mxu0 0
    %675 = vmatpush1.bf16.msra.mxu0 0
    %676 = vmatprep.subr.bf16.mxu0 0
    %677 = vmatpush1.bf16.msra.mxu0 0
    %678 = vmatprep.subr.bf16.mxu0 0
    %679 = vmatpush1.bf16.msra.mxu0 0
    %680 = vmatprep.subr.bf16.mxu0 0
    %681 = vmatpush1.bf16.msra.mxu0 0
    %682 = vmatprep.subr.bf16.mxu0 0
    %683 = vmatpush1.bf16.msra.mxu0 0
    %684 = vmatprep.subr.bf16.mxu0 0
    %685 = vmatpush1.bf16.msra.mxu0 0
    %686 = vmatprep.subr.bf16.mxu0 0
    %687 = vmatpush1.bf16.msra.mxu0 0
    %688 = vmatprep.subr.bf16.mxu0 0
    %689 = vmatpush1.bf16.msra.mxu0 0
    %690 = vmatprep.mubr.bf16.mxu0 0
    %691 = vmatmul.mubr.bf16.gmra.mrb[0].mxu0 %v587
    %v692 = vpop.f32.mrb[0].mxu0
    %v693 = vadd.f32 %v609, %v692
    %v694 = vpop.f32.mrb[0].mxu0
    %v695 = vpop.f32.mrb[0].mxu0
    %v696 = vpop.f32.mrb[0].mxu0
    %697 = vdwg.mxu0
    %v698 = vtanh.pop %v693
    %v699 = vpack.c.bf16 %v698, %v698
    %s700 = scalar_lea.vmem [#allocation5], 384
    %v701 = vld [vmem:[%s700] sm:$0xf]
    %v702 = vld [vmem:[%s700 + $0x4] sm:$0xf]
    %v703 = vld [vmem:[%s700 + $0x8] sm:$0xf]
    %v704 = vld [vmem:[%s700 + $0xc] sm:$0xf]
    %v705 = vld [vmem:[%s700 + $0x10] sm:$0xf]
    %v706 = vld [vmem:[%s700 + $0x14] sm:$0xf]
    %v707 = vld [vmem:[%s700 + $0x18] sm:$0xf]
    %v708 = vld [vmem:[%s700 + $0x1c] sm:$0xf]
    %v709 = vld [vmem:[%s700 + $0x20] sm:$0xf]
    %v710 = vld [vmem:[%s700 + $0x24] sm:$0xf]
    %v711 = vld [vmem:[%s700 + $0x28] sm:$0xf]
    %v712 = vld [vmem:[%s700 + $0x2c] sm:$0xf]
    %v713 = vld [vmem:[%s700 + $0x30] sm:$0xf]
    %v714 = vld [vmem:[%s700 + $0x34] sm:$0xf]
    %v715 = vld [vmem:[%s700 + $0x38] sm:$0xf]
    %v716 = vld [vmem:[%s700 + $0x3c] sm:$0xf]
    %v717 = vld [vmem:[#allocation7 + $0x6] sm:$0x1]
    %v718 = vlaneseq
    %v719 = vshrl.u32 %v718, 7
    %v720 = vsub.s32 0, %v719
    %v721 = vrot.slane %v717, %v720
    %v738 = vunpack.c.l.b16 %v701
    %v739 = vunpack.c.l.b16 %v702
    %v740 = vunpack.c.l.b16 %v703
    %v741 = vunpack.c.l.b16 %v704
    %v742 = vunpack.c.l.b16 %v705
    %v743 = vunpack.c.l.b16 %v706
    %v744 = vunpack.c.l.b16 %v707
    %v745 = vunpack.c.l.b16 %v708
    %v746 = vunpack.c.l.b16 %v709
    %v747 = vunpack.c.l.b16 %v710
    %v748 = vunpack.c.l.b16 %v711
    %v749 = vunpack.c.l.b16 %v712
    %v750 = vunpack.c.l.b16 %v713
    %v751 = vunpack.c.l.b16 %v714
    %v752 = vunpack.c.l.b16 %v715
    %v753 = vunpack.c.l.b16 %v716
    %v754 = vpack.c.b16 %v739, %v738
    %v755 = vpack.c.b16 %v741, %v740
    %v756 = vpack.c.b16 %v743, %v742
    %v757 = vpack.c.b16 %v745, %v744
    %v758 = vpack.c.b16 %v747, %v746
    %v759 = vpack.c.b16 %v749, %v748
    %v760 = vpack.c.b16 %v751, %v750
    %v761 = vpack.c.b16 %v753, %v752
    %770 = vmatprep.subr.bf16.mxu0 0
    %771 = vmatpush1.bf16.msra.mxu0 %v754
    %772 = vmatprep.subr.bf16.mxu0 0
    %773 = vmatpush1.bf16.msra.mxu0 %v755
    %774 = vmatprep.subr.bf16.mxu0 0
    %775 = vmatpush1.bf16.msra.mxu0 %v756
    %776 = vmatprep.subr.bf16.mxu0 0
    %777 = vmatpush1.bf16.msra.mxu0 %v757
    %778 = vmatprep.subr.bf16.mxu0 0
    %779 = vmatpush1.bf16.msra.mxu0 %v758
    %780 = vmatprep.subr.bf16.mxu0 0
    %781 = vmatpush1.bf16.msra.mxu0 %v759
    %782 = vmatprep.subr.bf16.mxu0 0
    %783 = vmatpush1.bf16.msra.mxu0 %v760
    %784 = vmatprep.subr.bf16.mxu0 0
    %785 = vmatpush1.bf16.msra.mxu0 %v761
    %786 = vmatprep.subr.bf16.mxu0 0
    %787 = vmatpush1.bf16.msra.mxu0 0
    %788 = vmatprep.subr.bf16.mxu0 0
    %789 = vmatpush1.bf16.msra.mxu0 0
    %790 = vmatprep.subr.bf16.mxu0 0
    %791 = vmatpush1.bf16.msra.mxu0 0
    %792 = vmatprep.subr.bf16.mxu0 0
    %793 = vmatpush1.bf16.msra.mxu0 0
    %794 = vmatprep.subr.bf16.mxu0 0
    %795 = vmatpush1.bf16.msra.mxu0 0
    %796 = vmatprep.subr.bf16.mxu0 0
    %797 = vmatpush1.bf16.msra.mxu0 0
    %798 = vmatprep.subr.bf16.mxu0 0
    %799 = vmatpush1.bf16.msra.mxu0 0
    %800 = vmatprep.subr.bf16.mxu0 0
    %801 = vmatpush1.bf16.msra.mxu0 0
    %802 = vmatprep.mubr.bf16.mxu0 0
    %803 = vmatmul.mubr.bf16.gmra.mrb[0].mxu0 %v699
    %v804 = vpop.f32.mrb[0].mxu0
    %v805 = vadd.f32 %v721, %v804
    %v806 = vpop.f32.mrb[0].mxu0
    %v807 = vpop.f32.mrb[0].mxu0
    %v808 = vpop.f32.mrb[0].mxu0
    %809 = vdwg.mxu0
    %v810 = vtanh.pop %v805
    %v811 = vpack.c.bf16 %v810, %v810
    %s812 = scalar_lea.vmem [#allocation5], 448
    %v813 = vld [vmem:[%s812] sm:$0xf]
    %v814 = vld [vmem:[%s812 + $0x4] sm:$0xf]
    %v815 = vld [vmem:[%s812 + $0x8] sm:$0xf]
    %v816 = vld [vmem:[%s812 + $0xc] sm:$0xf]
    %v817 = vld [vmem:[%s812 + $0x10] sm:$0xf]
    %v818 = vld [vmem:[%s812 + $0x14] sm:$0xf]
    %v819 = vld [vmem:[%s812 + $0x18] sm:$0xf]
    %v820 = vld [vmem:[%s812 + $0x1c] sm:$0xf]
    %v821 = vld [vmem:[%s812 + $0x20] sm:$0xf]
    %v822 = vld [vmem:[%s812 + $0x24] sm:$0xf]
    %v823 = vld [vmem:[%s812 + $0x28] sm:$0xf]
    %v824 = vld [vmem:[%s812 + $0x2c] sm:$0xf]
    %v825 = vld [vmem:[%s812 + $0x30] sm:$0xf]
    %v826 = vld [vmem:[%s812 + $0x34] sm:$0xf]
    %v827 = vld [vmem:[%s812 + $0x38] sm:$0xf]
    %v828 = vld [vmem:[%s812 + $0x3c] sm:$0xf]
    %v829 = vld [vmem:[#allocation7 + $0x7] sm:$0x1]
    %v830 = vlaneseq
    %v831 = vshrl.u32 %v830, 7
    %v832 = vsub.s32 0, %v831
    %v833 = vrot.slane %v829, %v832
    %v850 = vunpack.c.l.b16 %v813
    %v851 = vunpack.c.l.b16 %v814
    %v852 = vunpack.c.l.b16 %v815
    %v853 = vunpack.c.l.b16 %v816
    %v854 = vunpack.c.l.b16 %v817
    %v855 = vunpack.c.l.b16 %v818
    %v856 = vunpack.c.l.b16 %v819
    %v857 = vunpack.c.l.b16 %v820
    %v858 = vunpack.c.l.b16 %v821
    %v859 = vunpack.c.l.b16 %v822
    %v860 = vunpack.c.l.b16 %v823
    %v861 = vunpack.c.l.b16 %v824
    %v862 = vunpack.c.l.b16 %v825
    %v863 = vunpack.c.l.b16 %v826
    %v864 = vunpack.c.l.b16 %v827
    %v865 = vunpack.c.l.b16 %v828
    %v866 = vpack.c.b16 %v851, %v850
    %v867 = vpack.c.b16 %v853, %v852
    %v868 = vpack.c.b16 %v855, %v854
    %v869 = vpack.c.b16 %v857, %v856
    %v870 = vpack.c.b16 %v859, %v858
    %v871 = vpack.c.b16 %v861, %v860
    %v872 = vpack.c.b16 %v863, %v862
    %v873 = vpack.c.b16 %v865, %v864
    %882 = vmatprep.subr.bf16.mxu0 0
    %883 = vmatpush1.bf16.msra.mxu0 %v866
    %884 = vmatprep.subr.bf16.mxu0 0
    %885 = vmatpush1.bf16.msra.mxu0 %v867
    %886 = vmatprep.subr.bf16.mxu0 0
    %887 = vmatpush1.bf16.msra.mxu0 %v868
    %888 = vmatprep.subr.bf16.mxu0 0
    %889 = vmatpush1.bf16.msra.mxu0 %v869
    %890 = vmatprep.subr.bf16.mxu0 0
    %891 = vmatpush1.bf16.msra.mxu0 %v870
    %892 = vmatprep.subr.bf16.mxu0 0
    %893 = vmatpush1.bf16.msra.mxu0 %v871
    %894 = vmatprep.subr.bf16.mxu0 0
    %895 = vmatpush1.bf16.msra.mxu0 %v872
    %896 = vmatprep.subr.bf16.mxu0 0
    %897 = vmatpush1.bf16.msra.mxu0 %v873
    %898 = vmatprep.subr.bf16.mxu0 0
    %899 = vmatpush1.bf16.msra.mxu0 0
    %900 = vmatprep.subr.bf16.mxu0 0
    %901 = vmatpush1.bf16.msra.mxu0 0
    %902 = vmatprep.subr.bf16.mxu0 0
    %903 = vmatpush1.bf16.msra.mxu0 0
    %904 = vmatprep.subr.bf16.mxu0 0
    %905 = vmatpush1.bf16.msra.mxu0 0
    %906 = vmatprep.subr.bf16.mxu0 0
    %907 = vmatpush1.bf16.msra.mxu0 0
    %908 = vmatprep.subr.bf16.mxu0 0
    %909 = vmatpush1.bf16.msra.mxu0 0
    %910 = vmatprep.subr.bf16.mxu0 0
    %911 = vmatpush1.bf16.msra.mxu0 0
    %912 = vmatprep.subr.bf16.mxu0 0
    %913 = vmatpush1.bf16.msra.mxu0 0
    %914 = vmatprep.mubr.bf16.mxu0 0
    %915 = vmatmul.mubr.bf16.gmra.mrb[0].mxu0 %v811
    %v916 = vpop.f32.mrb[0].mxu0
    %v917 = vadd.f32 %v833, %v916
    %v918 = vpop.f32.mrb[0].mxu0
    %v919 = vpop.f32.mrb[0].mxu0
    %v920 = vpop.f32.mrb[0].mxu0
    %921 = vdwg.mxu0
    %v922 = vtanh.pop %v917
    %v923 = vpack.c.bf16 %v922, %v922
    %s924 = scalar_lea.vmem [#allocation5], 512
    %v925 = vld [vmem:[%s924] sm:$0xf]
    %v926 = vld [vmem:[%s924 + $0x4] sm:$0xf]
    %v927 = vld [vmem:[%s924 + $0x8] sm:$0xf]
    %v928 = vld [vmem:[%s924 + $0xc] sm:$0xf]
    %v929 = vld [vmem:[%s924 + $0x10] sm:$0xf]
    %v930 = vld [vmem:[%s924 + $0x14] sm:$0xf]
    %v931 = vld [vmem:[%s924 + $0x18] sm:$0xf]
    %v932 = vld [vmem:[%s924 + $0x1c] sm:$0xf]
    %v933 = vld [vmem:[%s924 + $0x20] sm:$0xf]
    %v934 = vld [vmem:[%s924 + $0x24] sm:$0xf]
    %v935 = vld [vmem:[%s924 + $0x28] sm:$0xf]
    %v936 = vld [vmem:[%s924 + $0x2c] sm:$0xf]
    %v937 = vld [vmem:[%s924 + $0x30] sm:$0xf]
    %v938 = vld [vmem:[%s924 + $0x34] sm:$0xf]
    %v939 = vld [vmem:[%s924 + $0x38] sm:$0xf]
    %v940 = vld [vmem:[%s924 + $0x3c] sm:$0xf]
    %v941 = vld [vmem:[#allocation7 + $0x8] sm:$0x1]
    %v942 = vlaneseq
    %v943 = vshrl.u32 %v942, 7
    %v944 = vsub.s32 0, %v943
    %v945 = vrot.slane %v941, %v944
    %v962 = vunpack.c.l.b16 %v925
    %v963 = vunpack.c.l.b16 %v926
    %v964 = vunpack.c.l.b16 %v927
    %v965 = vunpack.c.l.b16 %v928
    %v966 = vunpack.c.l.b16 %v929
    %v967 = vunpack.c.l.b16 %v930
    %v968 = vunpack.c.l.b16 %v931
    %v969 = vunpack.c.l.b16 %v932
    %v970 = vunpack.c.l.b16 %v933
    %v971 = vunpack.c.l.b16 %v934
    %v972 = vunpack.c.l.b16 %v935
    %v973 = vunpack.c.l.b16 %v936
    %v974 = vunpack.c.l.b16 %v937
    %v975 = vunpack.c.l.b16 %v938
    %v976 = vunpack.c.l.b16 %v939
    %v977 = vunpack.c.l.b16 %v940
    %v978 = vpack.c.b16 %v963, %v962
    %v979 = vpack.c.b16 %v965, %v964
    %v980 = vpack.c.b16 %v967, %v966
    %v981 = vpack.c.b16 %v969, %v968
    %v982 = vpack.c.b16 %v971, %v970
    %v983 = vpack.c.b16 %v973, %v972
    %v984 = vpack.c.b16 %v975, %v974
    %v985 = vpack.c.b16 %v977, %v976
    %994 = vmatprep.subr.bf16.mxu0 0
    %995 = vmatpush1.bf16.msra.mxu0 %v978
    %996 = vmatprep.subr.bf16.mxu0 0
    %997 = vmatpush1.bf16.msra.mxu0 %v979
    %998 = vmatprep.subr.bf16.mxu0 0
    %999 = vmatpush1.bf16.msra.mxu0 %v980
    %1000 = vmatprep.subr.bf16.mxu0 0
    %1001 = vmatpush1.bf16.msra.mxu0 %v981
    %1002 = vmatprep.subr.bf16.mxu0 0
    %1003 = vmatpush1.bf16.msra.mxu0 %v982
    %1004 = vmatprep.subr.bf16.mxu0 0
    %1005 = vmatpush1.bf16.msra.mxu0 %v983
    %1006 = vmatprep.subr.bf16.mxu0 0
    %1007 = vmatpush1.bf16.msra.mxu0 %v984
    %1008 = vmatprep.subr.bf16.mxu0 0
    %1009 = vmatpush1.bf16.msra.mxu0 %v985
    %1010 = vmatprep.subr.bf16.mxu0 0
    %1011 = vmatpush1.bf16.msra.mxu0 0
    %1012 = vmatprep.subr.bf16.mxu0 0
    %1013 = vmatpush1.bf16.msra.mxu0 0
    %1014 = vmatprep.subr.bf16.mxu0 0
    %1015 = vmatpush1.bf16.msra.mxu0 0
    %1016 = vmatprep.subr.bf16.mxu0 0
    %1017 = vmatpush1.bf16.msra.mxu0 0
    %1018 = vmatprep.subr.bf16.mxu0 0
    %1019 = vmatpush1.bf16.msra.mxu0 0
    %1020 = vmatprep.subr.bf16.mxu0 0
    %1021 = vmatpush1.bf16.msra.mxu0 0
    %1022 = vmatprep.subr.bf16.mxu0 0
    %1023 = vmatpush1.bf16.msra.mxu0 0
    %1024 = vmatprep.subr.bf16.mxu0 0
    %1025 = vmatpush1.bf16.msra.mxu0 0
    %1026 = vmatprep.mubr.bf16.mxu0 0
    %1027 = vmatmul.mubr.bf16.gmra.mrb[0].mxu0 %v923
    %v1028 = vpop.f32.mrb[0].mxu0
    %v1029 = vadd.f32 %v945, %v1028
    %v1030 = vpop.f32.mrb[0].mxu0
    %v1031 = vpop.f32.mrb[0].mxu0
    %v1032 = vpop.f32.mrb[0].mxu0
    %1033 = vdwg.mxu0
    %v1034 = vtanh.pop %v1029
    %v1035 = vpack.c.bf16 %v1034, %v1034
    %s1036 = scalar_lea.vmem [#allocation5], 576
    %v1037 = vld [vmem:[%s1036] sm:$0xf]
    %v1038 = vld [vmem:[%s1036 + $0x4] sm:$0xf]
    %v1039 = vld [vmem:[%s1036 + $0x8] sm:$0xf]
    %v1040 = vld [vmem:[%s1036 + $0xc] sm:$0xf]
    %v1041 = vld [vmem:[%s1036 + $0x10] sm:$0xf]
    %v1042 = vld [vmem:[%s1036 + $0x14] sm:$0xf]
    %v1043 = vld [vmem:[%s1036 + $0x18] sm:$0xf]
    %v1044 = vld [vmem:[%s1036 + $0x1c] sm:$0xf]
    %v1045 = vld [vmem:[%s1036 + $0x20] sm:$0xf]
    %v1046 = vld [vmem:[%s1036 + $0x24] sm:$0xf]
    %v1047 = vld [vmem:[%s1036 + $0x28] sm:$0xf]
    %v1048 = vld [vmem:[%s1036 + $0x2c] sm:$0xf]
    %v1049 = vld [vmem:[%s1036 + $0x30] sm:$0xf]
    %v1050 = vld [vmem:[%s1036 + $0x34] sm:$0xf]
    %v1051 = vld [vmem:[%s1036 + $0x38] sm:$0xf]
    %v1052 = vld [vmem:[%s1036 + $0x3c] sm:$0xf]
    %v1053 = vld [vmem:[#allocation7 + $0x9] sm:$0x1]
    %v1054 = vlaneseq
    %v1055 = vshrl.u32 %v1054, 7
    %v1056 = vsub.s32 0, %v1055
    %v1057 = vrot.slane %v1053, %v1056
    %v1074 = vunpack.c.l.b16 %v1037
    %v1075 = vunpack.c.l.b16 %v1038
    %v1076 = vunpack.c.l.b16 %v1039
    %v1077 = vunpack.c.l.b16 %v1040
    %v1078 = vunpack.c.l.b16 %v1041
    %v1079 = vunpack.c.l.b16 %v1042
    %v1080 = vunpack.c.l.b16 %v1043
    %v1081 = vunpack.c.l.b16 %v1044
    %v1082 = vunpack.c.l.b16 %v1045
    %v1083 = vunpack.c.l.b16 %v1046
    %v1084 = vunpack.c.l.b16 %v1047
    %v1085 = vunpack.c.l.b16 %v1048
    %v1086 = vunpack.c.l.b16 %v1049
    %v1087 = vunpack.c.l.b16 %v1050
    %v1088 = vunpack.c.l.b16 %v1051
    %v1089 = vunpack.c.l.b16 %v1052
    %v1090 = vpack.c.b16 %v1075, %v1074
    %v1091 = vpack.c.b16 %v1077, %v1076
    %v1092 = vpack.c.b16 %v1079, %v1078
    %v1093 = vpack.c.b16 %v1081, %v1080
    %v1094 = vpack.c.b16 %v1083, %v1082
    %v1095 = vpack.c.b16 %v1085, %v1084
    %v1096 = vpack.c.b16 %v1087, %v1086
    %v1097 = vpack.c.b16 %v1089, %v1088
    %1106 = vmatprep.subr.bf16.mxu0 0
    %1107 = vmatpush1.bf16.msra.mxu0 %v1090
    %1108 = vmatprep.subr.bf16.mxu0 0
    %1109 = vmatpush1.bf16.msra.mxu0 %v1091
    %1110 = vmatprep.subr.bf16.mxu0 0
    %1111 = vmatpush1.bf16.msra.mxu0 %v1092
    %1112 = vmatprep.subr.bf16.mxu0 0
    %1113 = vmatpush1.bf16.msra.mxu0 %v1093
    %1114 = vmatprep.subr.bf16.mxu0 0
    %1115 = vmatpush1.bf16.msra.mxu0 %v1094
    %1116 = vmatprep.subr.bf16.mxu0 0
    %1117 = vmatpush1.bf16.msra.mxu0 %v1095
    %1118 = vmatprep.subr.bf16.mxu0 0
    %1119 = vmatpush1.bf16.msra.mxu0 %v1096
    %1120 = vmatprep.subr.bf16.mxu0 0
    %1121 = vmatpush1.bf16.msra.mxu0 %v1097
    %1122 = vmatprep.subr.bf16.mxu0 0
    %1123 = vmatpush1.bf16.msra.mxu0 0
    %1124 = vmatprep.subr.bf16.mxu0 0
    %1125 = vmatpush1.bf16.msra.mxu0 0
    %1126 = vmatprep.subr.bf16.mxu0 0
    %1127 = vmatpush1.bf16.msra.mxu0 0
    %1128 = vmatprep.subr.bf16.mxu0 0
    %1129 = vmatpush1.bf16.msra.mxu0 0
    %1130 = vmatprep.subr.bf16.mxu0 0
    %1131 = vmatpush1.bf16.msra.mxu0 0
    %1132 = vmatprep.subr.bf16.mxu0 0
    %1133 = vmatpush1.bf16.msra.mxu0 0
    %1134 = vmatprep.subr.bf16.mxu0 0
    %1135 = vmatpush1.bf16.msra.mxu0 0
    %1136 = vmatprep.subr.bf16.mxu0 0
    %1137 = vmatpush1.bf16.msra.mxu0 0
    %1138 = vmatprep.mubr.bf16.mxu0 0
    %1139 = vmatmul.mubr.bf16.gmra.mrb[0].mxu0 %v1035
    %v1140 = vpop.f32.mrb[0].mxu0
    %v1141 = vadd.f32 %v1057, %v1140
    %v1142 = vpop.f32.mrb[0].mxu0
    %v1143 = vpop.f32.mrb[0].mxu0
    %v1144 = vpop.f32.mrb[0].mxu0
    %1145 = vdwg.mxu0
    %v1146 = vxor.u32 %v1141, 2147483648
    %v1147 = vmul.f32 %v1146, 1.442695
    %v1148 = vpow.pop %v1147
    %v1149 = vadd.f32 %v1148, 1.0
    %v1150 = vrcp.pop %v1149
    %v1151 = vmul.f32 1.0, %v1150
    %1152 = vst.msk [vmem:[#allocation8] sm:$0xff] %vm94, %v1151
    // Predicated region
    $region26: #{autoencoder_forward.1} parent=1 // pred_check
      _
    $region27: #{autoencoder_forward.1} parent=1 // pred_check_branch
      %1154 = sbr.rel (0) target = $region29
    $region28: #{autoencoder_forward.1} parent=1 // pred_region
      %s1156 = ssub.s32 128, 128
      %1157 = vsyncadd [#allocation4], %s1156
      %s1159 = sshll.u32 [#allocation8], 4
      %s1160 = int_to_ptr.vmem [resolvable:$true] %s1159
      %1162 = dma.vmem_to_hbm [thread:$0]  %s1160, 128, %s3, [#allocation4]
    $region29: #{autoencoder_forward.1} parent=1 // pred_fallthru
      _
    // Predicated region
    $region30: #{autoencoder_forward.1} parent=1 // pred_check
      _
    $region31: #{autoencoder_forward.1} parent=1 // pred_check_branch
      %1164 = sbr.rel (0) target = $region33
    $region32: #{autoencoder_forward.1} parent=1 // pred_region
      %1165 = dma.done [#allocation4], 128
    $region33: #{autoencoder_forward.1} parent=1 // pred_fallthru
      _
    %1166 = vsyncpa [#allocation3], 1
    %1167 = vsyncpa [#allocation6], 1
    %1168 = vsyncpa [#allocation4], 1

</llo_original>
